<compile_context>
chip_gen: v5e
topology: v5e:2x2
jax: 0.10.0
libtpu: 0.0.40
codegen_flags: <defaults>
</compile_context>

<pallas_src>
import math

import jax
import jax.numpy as jnp
from jax.experimental import pallas as pl
from jax.experimental.pallas import tpu as pltpu

LANES = 128            # vreg lane width: last dim of every block
MAX_TILE_ROWS = 4096   # 4096 x 128 f32 = 2 MiB per buffer (safe on v5e/v6e/v7x)
SMALL_N_FASTPATH = 16384  # below this, a fused XLA elementwise op beats kernel launch cost


def _round_up(x, m):
    return ((x + m - 1) // m) * m


def _linear_kernel(x_ref, w_ref, b_ref, o_ref):
    # x_ref / o_ref: (tile_rows, 128) VMEM tiles (lane-dense).
    # w_ref / b_ref: (1, 1) SMEM scalars (weight, bias of nn.Linear(1, 1)).
    w = w_ref[0, 0]
    b = b_ref[0, 0]
    # Pure VPU FMA; the kernel stays HBM-DMA bound with dense loads/stores.
    o_ref[...] = x_ref[...] * w + b


def my_linear_forward(x, weight, bias, *, min_kernel_elems=SMALL_N_FASTPATH):
    """Pallas implementation of nn.Linear(1, 1): y = x @ W^T + b.

    x: (N, 1) float32, weight: (1, 1), bias: (1,)  ->  y: (N, 1)
    """
    n, in_f = x.shape
    out_f, _ = weight.shape
    assert in_f == 1 and out_f == 1, "MyLinear is nn.Linear(1, 1)"

    # Tiny inputs: the ~us pallas_call launch overhead dominates; a fused XLA
    # elementwise op is strictly faster.
    if n < min_kernel_elems:
        return x * weight[0, 0] + bias[0]

    # ---- lane-dense re-layout: (N, 1) -> (rows, 128) ----
    flat = x.reshape(-1)                      # free metadata change
    padded_n = _round_up(n, LANES)
    # TODO(synk): for N % 128 != 0 the pad + final slice are still two extra
    # full-array copies; a memory_space=pl.ANY manual-DMA path would remove
    # them.  The aligned-N path below is already completely copy-free.
    if padded_n != n:
        flat = jnp.pad(flat, (0, padded_n - n))   # pads by < 128 elements
    rows = padded_n // LANES
    x2d = flat.reshape(rows, LANES)

    # Tile selection:
    #  * never above MAX_TILE_ROWS (VMEM budget on every generation)
    #  * >= 2 grid steps once rows > 16, so v7x can shard across both TCs
    #  * last block may be partial; Pallas masks the out-of-bounds rows.
    if rows <= 16:
        tile_rows = rows                      # single full-array block
    else:
        tile_rows = min(MAX_TILE_ROWS, _round_up(pl.cdiv(rows, 2), 8))
    grid = (pl.cdiv(rows, tile_rows),)

    # weight / bias live in SMEM as (1, 1) scalars
    w_smem = weight.reshape(1, 1)
    b_smem = bias.reshape(1, 1)

    out2d = pl.pallas_call(
        _linear_kernel,
        out_shape=jax.ShapeDtypeStruct((rows, LANES), x.dtype),
        grid=grid,
        in_specs=[
            pl.BlockSpec((tile_rows, LANES), lambda i: (i, 0)),
            pl.BlockSpec(memory_space=pltpu.MemorySpace.SMEM),
            pl.BlockSpec(memory_space=pltpu.MemorySpace.SMEM),
        ],
        out_specs=pl.BlockSpec((tile_rows, LANES), lambda i: (i, 0)),
        compiler_params=pltpu.CompilerParams(
            dimension_semantics=("parallel",),
        ),
        cost_estimate=pl.CostEstimate(
            flops=2 * n, transcendentals=0, bytes_accessed=8 * n),
    )(x2d, w_smem, b_smem)

    out_flat = out2d.reshape(-1)
    if padded_n != n:
        out_flat = out_flat[:n]
    return out_flat.reshape(n, out_f)


def init_params(key):
    """Deterministic init mimicking torch.nn.Linear(1, 1) default init:
    U(-1/sqrt(fan_in), 1/sqrt(fan_in)) with fan_in = 1."""
    k_w, k_b = jax.random.split(key)
    bound = 1.0 / math.sqrt(1.0)
    weight = jax.random.uniform(k_w, (1, 1), jnp.float32, -bound, bound)
    bias = jax.random.uniform(k_b, (1,), jnp.float32, -bound, bound)
    return weight, bias


if __name__ == "__main__":
    key = jax.random.PRNGKey(0)
    k_x, k_x2, k_x3, k_p = jax.random.split(key, 4)
    weight, bias = init_params(k_p)

    def ref(v):
        return v @ weight.T + bias

    # Small batch of scalar features, consistent with nn.Linear(1, 1);
    # force the Pallas kernel path even at this size.
    x_small = jax.random.normal(k_x, (8, 1), jnp.float32)
    y_small = jax.block_until_ready(
        my_linear_forward(x_small, weight, bias, min_kernel_elems=0))
    assert y_small.shape == (8, 1)
    assert jnp.allclose(y_small, ref(x_small), atol=1e-6), "kernel mismatch (N=8)"

    # Same small batch through the plain-JAX fast path.
    y_fast = jax.block_until_ready(my_linear_forward(x_small, weight, bias))
    assert jnp.allclose(y_fast, ref(x_small), atol=1e-6), "fast-path mismatch (N=8)"

    # Large 128-aligned batch: copy-free, multi-tile (2 MiB blocks) pipelined path.
    x_big = jax.random.normal(k_x2, (1 << 21, 1), jnp.float32)
    y_big = jax.block_until_ready(my_linear_forward(x_big, weight, bias))
    assert y_big.shape == (1 << 21, 1)
    assert jnp.allclose(y_big, ref(x_big), atol=1e-5), "mismatch (aligned N)"

    # Misaligned batch: exercises the partial last block + minimal (<128) pad.
    x_odd = jax.random.normal(k_x3, (70000, 1), jnp.float32)
    y_odd = jax.block_until_ready(my_linear_forward(x_odd, weight, bias))
    assert y_odd.shape == (70000, 1)
    assert jnp.allclose(y_odd, ref(x_odd), atol=1e-5), "mismatch (misaligned N)"

    print("KERNEL_OK")
</pallas_src>

<mosaic_0001>
module attributes {stable_mosaic.version = 11 : i64} {
  func.func @_linear_kernel(%arg0: i32, %arg1: memref<1x128xf32, #tpu.memory_space<vmem>>, %arg2: memref<1x1xf32, #tpu.memory_space<smem>>, %arg3: memref<1x1xf32, #tpu.memory_space<smem>>, %arg4: memref<1x128xf32, #tpu.memory_space<vmem>>) attributes {dimension_semantics = [#tpu.dimension_semantics<parallel>], iteration_bounds = array<i64: 1>, scalar_prefetch = 0 : i64, scratch_operands = 0 : i64, tpu.core_type = #tpu.core_type<tc>, window_params = [{transform_indices = @transform_0, window_bounds = array<i64: 1, 128>}, {transform_indices = @transform_1, window_bounds = array<i64: 1, 1>}, {transform_indices = @transform_2, window_bounds = array<i64: 1, 1>}, {transform_indices = @transform_3, window_bounds = array<i64: 1, 128>}]} {
    %c0 = arith.constant 0 : index
    %c0_0 = arith.constant 0 : index
    %0 = memref.load %arg2[%c0, %c0_0] : memref<1x1xf32, #tpu.memory_space<smem>>
    %c0_1 = arith.constant 0 : index
    %c0_2 = arith.constant 0 : index
    %1 = memref.load %arg3[%c0_1, %c0_2] : memref<1x1xf32, #tpu.memory_space<smem>>
    %c0_3 = arith.constant 0 : index
    %c0_4 = arith.constant 0 : index
    %2 = vector.load %arg1[%c0_3, %c0_4] : memref<1x128xf32, #tpu.memory_space<vmem>>, vector<1x128xf32>
    %3 = vector.broadcast %0 : f32 to vector<1x128xf32>
    %4 = arith.mulf %2, %3 : vector<1x128xf32>
    %5 = vector.broadcast %1 : f32 to vector<1x128xf32>
    %6 = arith.addf %4, %5 : vector<1x128xf32>
    %c0_5 = arith.constant 0 : index
    %c0_6 = arith.constant 0 : index
    %7 = vector.load %arg4[%c0_5, %c0_6] : memref<1x128xf32, #tpu.memory_space<vmem>>, vector<1x128xf32>
    tpu.vector_store %arg4[%c0_5, %c0_6], %6 {strides = array<i32>} : memref<1x128xf32, #tpu.memory_space<vmem>>, vector<1x128xf32>,
    return
  }
  func.func @transform_0(%arg0: i32) -> (i32, i32) {
    %c0_i32 = arith.constant 0 : i32
    %c0_i32_0 = arith.constant 0 : i32
    return %arg0, %c0_i32 : i32, i32
  }
  func.func @transform_1(%arg0: i32) -> (i32, i32) {
    %c0_i32 = arith.constant 0 : i32
    %c0_i32_0 = arith.constant 0 : i32
    %c0_i32_1 = arith.constant 0 : i32
    return %c0_i32, %c0_i32_0 : i32, i32
  }
  func.func @transform_2(%arg0: i32) -> (i32, i32) {
    %c0_i32 = arith.constant 0 : i32
    %c0_i32_0 = arith.constant 0 : i32
    %c0_i32_1 = arith.constant 0 : i32
    return %c0_i32, %c0_i32_0 : i32, i32
  }
  func.func @transform_3(%arg0: i32) -> (i32, i32) {
    %c0_i32 = arith.constant 0 : i32
    %c0_i32_0 = arith.constant 0 : i32
    return %arg0, %c0_i32 : i32, i32
  }
}

</mosaic_0001>

<llo_original>
// kernel: tpu_custom_call.1
$region0: #{tpu_custom_call.1}
  #allocation0 [shape = 'u32[]', space=smem, size = 0x4, offset = 0x4, fixed_abs, tag = 'smem constant byte address 0x4 - core index']
  #allocation1 [shape = 'u32[72,128]{1,0:T(1,128)}', space=vmem, size = 0x9000, scoped, tag = 'internal scratch']
  #allocation2 [shape = 'f32[1,1]{1,0:T(1,128)S(6)}', space=smem, size = 0x200, scoped, tag = 'scoped memory for tpu_custom_call.1']
  #allocation3 [shape = 'f32[1,1]{1,0:T(1,128)S(6)}', space=smem, size = 0x200, scoped, tag = 'scoped memory for tpu_custom_call.1']
  %s0 = inlined_call_operand.vmem [shape: f32[1,128], index: 0, kind: input, shape index: {}]
  %s1 = inlined_call_operand.<no memory space> [shape: f32[1,1], index: 1, kind: input, shape index: {}]
  %s2 = inlined_call_operand.<no memory space> [shape: f32[1,1], index: 2, kind: input, shape index: {}]
  %s3 = inlined_call_operand.hbm [shape: f32[1,128], index: 3, kind: output, shape index: {}]
  %s4 = sld [smem:[#allocation0]]
  $region22: #{tpu_custom_call.1} parent=0
    _
  %s6 = ssub.s32 1, %s4
  %s7 = scalar_select 0, %s6, %s4
  %8 = sst [smem:[#allocation2]] %s1
  %9 = sst [smem:[#allocation3]] %s2
  $region1: #{tpu_custom_call.1} parent=0
    #allocation4 [shape = 'u8[512]{0}', space=vmem, size = 0x400, scoped, tag = 'output window, operand 0, single buffered']
    #allocation5 [shape = 's32[1]{0}', space=sflag, size = 0x4, scoped, tag = 'scoped memory for tpu_custom_call.1']
    %10 = vsyncpa [#allocation5], 0
    // Predicated region
    $region2: #{tpu_custom_call.1} parent=1 // pred_check
      _
    $region3: #{tpu_custom_call.1} parent=1 // pred_check_branch
      %12 = sbr.rel (0) target = $region5
    $region4: #{tpu_custom_call.1} parent=1 // pred_region
      _
    $region5: #{tpu_custom_call.1} parent=1 // pred_fallthru
      _
    // Predicated region
    $region6: #{tpu_custom_call.1} parent=1 // pred_check
      _
    $region7: #{tpu_custom_call.1} parent=1 // pred_check_branch
      %14 = sbr.rel (0) target = $region9
    $region8: #{tpu_custom_call.1} parent=1 // pred_region
      _
    $region9: #{tpu_custom_call.1} parent=1 // pred_fallthru
      _
    // Predicated region
    $region10: #{tpu_custom_call.1} parent=1 // pred_check
      _
    $region11: #{tpu_custom_call.1} parent=1 // pred_check_branch
      %16 = sbr.rel (0) target = $region13
    $region12: #{tpu_custom_call.1} parent=1 // pred_region
      _
    $region13: #{tpu_custom_call.1} parent=1 // pred_fallthru
      _
    %s17 = sld [smem:[#allocation2]]
    %s18 = sld [smem:[#allocation3]]
    %v19 = vld [vmem:[%s0] sm:$0x1]
    %v20 = vstv %s17
    %v21 = vmul.f32 %v19, %v20
    %v22 = vstv %s18
    %v23 = vadd.f32 %v21, %v22
    %24 = vst [vmem:[#allocation4] sm:$0x1] %v23
    // Predicated region
    $region14: #{tpu_custom_call.1} parent=1 // pred_check
      _
    $region15: #{tpu_custom_call.1} parent=1 // pred_check_branch
      %26 = sbr.rel (0) target = $region17
    $region16: #{tpu_custom_call.1} parent=1 // pred_region
      %28 = vsyncadd [#allocation5], 0
      %s30 = sshll.u32 [#allocation4], 4
      %s31 = int_to_ptr.vmem [resolvable:$true] %s30
      %s32 = sshll.u32 %s3, 4
      %s33 = int_to_ptr.hbm [resolvable:$true] %s32
      %35 = dma.vmem_to_hbm [thread:$0]  %s31, 16, %s33, [#allocation5]
    $region17: #{tpu_custom_call.1} parent=1 // pred_fallthru
      _
    // Predicated region
    $region18: #{tpu_custom_call.1} parent=1 // pred_check
      _
    $region19: #{tpu_custom_call.1} parent=1 // pred_check_branch
      %37 = sbr.rel (0) target = $region21
    $region20: #{tpu_custom_call.1} parent=1 // pred_region
      %39 = dma.done [#allocation5], 16
    $region21: #{tpu_custom_call.1} parent=1 // pred_fallthru
      _
    %40 = vsyncpa [#allocation5], 1

</llo_original>
